<compile_context>
chip_gen: v7x
topology: tpu7x:2x2x1
jax: 0.10.0
libtpu: 0.0.40
codegen_flags: <defaults>
</compile_context>

<pallas_src>
import functools
import math

import jax
import jax.numpy as jnp
from jax.experimental import pallas as pl
from jax.experimental.pallas import tpu as pltpu


def _dice_partial_kernel(x_ref, t_ref, inter_ref, denom_ref, *,
                         rows_total, tile_rows, need_mask):
    x = x_ref[...].astype(jnp.float32)
    t = t_ref[...].astype(jnp.float32)

    if need_mask:
        # Tail row-tile: zero rows past the true extent R so out-of-bounds
        # garbage from the last (partial) tile cannot leak into the sums.
        base = pl.program_id(0) * tile_rows
        row = jax.lax.broadcasted_iota(jnp.int32, x.shape, dimension=1)
        valid = row < (rows_total - base)
        x = jnp.where(valid, x, 0.0)
        t = jnp.where(valid, t, 0.0)

    # Per-sample, per-lane partials (lane-dense stores: last dim = 128).
    # The cheap cross-lane reduce is deferred to the wrapper; numerator and
    # denominator accumulators are fused into a single sum(x + t).
    inter_ref[...] = jnp.sum(x * t, axis=1)[None]   # (1, N, 128)
    denom_ref[...] = jnp.sum(x + t, axis=1)[None]   # (1, N, 128)


def binary_dice_loss(inp, tgt, smooth=1e-5, beta=1, size_mean=True):
    # beta / size_mean do not affect the PyTorch forward; kept for API parity.
    N = tgt.shape[0]
    x = inp.reshape(N, -1)          # keep original dtype: no HBM upcast copy
    t = tgt.reshape(N, -1)
    D = x.shape[1]

    LANES = 128
    # Pad only to a lane multiple, and only when required (no-op for typical
    # C*H*W); zero padding is benign for all three sums.
    D128 = ((D + LANES - 1) // LANES) * LANES
    if D128 != D:
        x = jnp.pad(x, ((0, 0), (0, D128 - D)))
        t = jnp.pad(t, ((0, 0), (0, D128 - D)))
    R = D128 // LANES

    # Full sublane packing: (N, R, 128) so even N=2 fills 8x128 vregs.
    x = x.reshape(N, R, LANES)
    t = t.reshape(N, R, LANES)

    # Row-tile so each input block is ~4 MiB (2 inputs x 2 pipeline buffers
    # stays well under v7x's 64 MiB VMEM while saturating HBM on every
    # generation); single grid step when everything fits.
    itemsize = max(x.dtype.itemsize, t.dtype.itemsize)
    budget_rows = max(8, (4 * 1024 * 1024) // max(1, N * LANES * itemsize))
    budget_rows = max(8, (budget_rows // 8) * 8)
    if R <= budget_rows:
        TR, grid_r = R, 1
    else:
        TR = budget_rows
        grid_r = math.ceil(R / TR)
    need_mask = (grid_r * TR != R)

    kernel = functools.partial(_dice_partial_kernel,
                               rows_total=R, tile_rows=TR, need_mask=need_mask)

    # Explicit VMEM budget: 2 inputs x 2 pipeline buffers x block + outputs,
    # plus headroom; clamped to a safe range for all generations.
    block_in = N * TR * LANES * (x.dtype.itemsize + t.dtype.itemsize)
    block_out = 2 * N * LANES * 4
    vmem_limit = int(min(max(2 * (block_in + block_out) + (8 << 20), 16 << 20),
                         48 << 20))

    inter_p, denom_p = pl.pallas_call(
        kernel,
        out_shape=(
            jax.ShapeDtypeStruct((grid_r, N, LANES), jnp.float32),
            jax.ShapeDtypeStruct((grid_r, N, LANES), jnp.float32),
        ),
        grid_spec=pltpu.PrefetchScalarGridSpec(
            num_scalar_prefetch=0,
            grid=(grid_r,),
            in_specs=[
                pl.BlockSpec((N, TR, LANES), lambda k: (0, k, 0)),
                pl.BlockSpec((N, TR, LANES), lambda k: (0, k, 0)),
            ],
            out_specs=[
                pl.BlockSpec((1, N, LANES), lambda k: (k, 0, 0)),
                pl.BlockSpec((1, N, LANES), lambda k: (k, 0, 0)),
            ],
        ),
        compiler_params=pltpu.CompilerParams(
            dimension_semantics=("parallel",),   # megacore-splittable on v7x
            vmem_limit_bytes=vmem_limit),
    )(x, t)

    # Tiny O(grid * N * 128) finish in the wrapper: fold per-block/per-lane
    # partials into the dice formula (matches the PyTorch forward exactly).
    inter = jnp.sum(inter_p, axis=(0, 2))   # (N,)
    denom = jnp.sum(denom_p, axis=(0, 2))   # (N,)
    dice = (2.0 * inter + smooth) / (denom + smooth)
    return 1.0 - jnp.sum(dice) / N


def _reference(inp, tgt, smooth=1e-5):
    N = tgt.shape[0]
    xf = inp.reshape(N, -1).astype(jnp.float32)
    tf = tgt.reshape(N, -1).astype(jnp.float32)
    inter = jnp.sum(xf * tf, axis=1)
    dice = (2.0 * inter + smooth) / (jnp.sum(xf, 1) + jnp.sum(tf, 1) + smooth)
    return 1.0 - jnp.sum(dice) / N


if __name__ == "__main__":
    key = jax.random.PRNGKey(0)
    k1, k2 = jax.random.split(key)
    # PyTorch-style NCHW inputs: predictions in [0,1], binary targets.
    x = jax.nn.sigmoid(jax.random.normal(k1, (2, 4, 16, 16), dtype=jnp.float32))
    t = (jax.random.uniform(k2, (2, 4, 16, 16)) > 0.5).astype(jnp.float32)

    loss = binary_dice_loss(x, t, smooth=1e-5)
    loss = jax.block_until_ready(loss)

    ref = _reference(x, t, smooth=1e-5)
    assert jnp.allclose(loss, ref, atol=1e-5, rtol=1e-5), (loss, ref)
    print("KERNEL_OK")
</pallas_src>

<mosaic_0001>
module attributes {stable_mosaic.version = 11 : i64} {
  func.func @_dice_partial_kernel(%arg0: i32, %arg1: memref<2x8x128xf32, #tpu.memory_space<vmem>>, %arg2: memref<2x8x128xf32, #tpu.memory_space<vmem>>, %arg3: memref<1x2x128xf32, #tpu.memory_space<vmem>>, %arg4: memref<1x2x128xf32, #tpu.memory_space<vmem>>) attributes {dimension_semantics = [#tpu.dimension_semantics<parallel>], iteration_bounds = array<i64: 1>, scalar_prefetch = 0 : i64, scratch_operands = 0 : i64, tpu.core_type = #tpu.core_type<tc>, window_params = [{transform_indices = @transform_0, window_bounds = array<i64: 2, 8, 128>}, {transform_indices = @transform_1, window_bounds = array<i64: 2, 8, 128>}, {transform_indices = @transform_2, window_bounds = array<i64: 1, 2, 128>}, {transform_indices = @transform_3, window_bounds = array<i64: 1, 2, 128>}]} {
    %c0 = arith.constant 0 : index
    %c0_0 = arith.constant 0 : index
    %c0_1 = arith.constant 0 : index
    %0 = vector.load %arg1[%c0, %c0_0, %c0_1] : memref<2x8x128xf32, #tpu.memory_space<vmem>>, vector<2x8x128xf32>
    %c0_2 = arith.constant 0 : index
    %c0_3 = arith.constant 0 : index
    %c0_4 = arith.constant 0 : index
    %1 = vector.load %arg2[%c0_2, %c0_3, %c0_4] : memref<2x8x128xf32, #tpu.memory_space<vmem>>, vector<2x8x128xf32>
    %2 = arith.mulf %0, %1 : vector<2x8x128xf32>
    %cst = arith.constant dense<0.000000e+00> : vector<2x128xf32>
    %3 = vector.multi_reduction <add>, %2, %cst [1] : vector<2x8x128xf32> to vector<2x128xf32>
    %4 = vector.shape_cast %3 : vector<2x128xf32> to vector<1x2x128xf32>
    %c0_5 = arith.constant 0 : index
    %c0_6 = arith.constant 0 : index
    %c0_7 = arith.constant 0 : index
    %5 = vector.load %arg3[%c0_5, %c0_6, %c0_7] : memref<1x2x128xf32, #tpu.memory_space<vmem>>, vector<1x2x128xf32>
    tpu.vector_store %arg3[%c0_5, %c0_6, %c0_7], %4 {strides = array<i32>} : memref<1x2x128xf32, #tpu.memory_space<vmem>>, vector<1x2x128xf32>,
    %6 = arith.addf %0, %1 : vector<2x8x128xf32>
    %cst_8 = arith.constant dense<0.000000e+00> : vector<2x128xf32>
    %7 = vector.multi_reduction <add>, %6, %cst_8 [1] : vector<2x8x128xf32> to vector<2x128xf32>
    %8 = vector.shape_cast %7 : vector<2x128xf32> to vector<1x2x128xf32>
    %c0_9 = arith.constant 0 : index
    %c0_10 = arith.constant 0 : index
    %c0_11 = arith.constant 0 : index
    %9 = vector.load %arg4[%c0_9, %c0_10, %c0_11] : memref<1x2x128xf32, #tpu.memory_space<vmem>>, vector<1x2x128xf32>
    tpu.vector_store %arg4[%c0_9, %c0_10, %c0_11], %8 {strides = array<i32>} : memref<1x2x128xf32, #tpu.memory_space<vmem>>, vector<1x2x128xf32>,
    return
  }
  func.func @transform_0(%arg0: i32) -> (i32, i32, i32) {
    %c0_i32 = arith.constant 0 : i32
    %c0_i32_0 = arith.constant 0 : i32
    %c0_i32_1 = arith.constant 0 : i32
    return %c0_i32, %arg0, %c0_i32_0 : i32, i32, i32
  }
  func.func @transform_1(%arg0: i32) -> (i32, i32, i32) {
    %c0_i32 = arith.constant 0 : i32
    %c0_i32_0 = arith.constant 0 : i32
    %c0_i32_1 = arith.constant 0 : i32
    return %c0_i32, %arg0, %c0_i32_0 : i32, i32, i32
  }
  func.func @transform_2(%arg0: i32) -> (i32, i32, i32) {
    %c0_i32 = arith.constant 0 : i32
    %c0_i32_0 = arith.constant 0 : i32
    %c0_i32_1 = arith.constant 0 : i32
    return %arg0, %c0_i32, %c0_i32_0 : i32, i32, i32
  }
  func.func @transform_3(%arg0: i32) -> (i32, i32, i32) {
    %c0_i32 = arith.constant 0 : i32
    %c0_i32_0 = arith.constant 0 : i32
    %c0_i32_1 = arith.constant 0 : i32
    return %arg0, %c0_i32, %c0_i32_0 : i32, i32, i32
  }
}

</mosaic_0001>

<llo_original>
// kernel: tpu_custom_call.1
$region0: #{tpu_custom_call.1}
  #allocation0 [shape = 'u32[]', space=smem, size = 0x4, offset = 0x4, fixed_abs, tag = 'smem constant byte address 0x4 - core index']
  #allocation1 [shape = 'u32[144,128]{1,0:T(1,128)}', space=vmem, size = 0x12000, scoped, tag = 'internal scratch']
  %s0 = inlined_call_operand.hbm [shape: f32[2,8,128], index: 0, kind: input, shape index: {}]
  %s1 = inlined_call_operand.hbm [shape: f32[2,8,128], index: 1, kind: input, shape index: {}]
  %s2 = inlined_call_operand.hbm [shape: f32[1,2,128], index: 2, kind: output, shape index: {0}]
  %s3 = inlined_call_operand.hbm [shape: f32[1,2,128], index: 3, kind: output, shape index: {1}]
  %4 = xla_tuple %s2, %s3
  %s5 = sld [smem:[#allocation0]]
  $region34: #{tpu_custom_call.1} parent=0
    _
  %s7 = ssub.s32 1, %s5
  %s8 = scalar_select 0, %s7, %s5
  $region1: #{tpu_custom_call.1} parent=0
    #allocation2 [shape = 'u8[8192]{0}', space=vmem, size = 0x2000, scoped, tag = 'input window, operand 0, single buffered']
    #allocation3 [shape = 's32[1]{0}', space=sflag, size = 0x4, scoped, tag = 'scoped memory for tpu_custom_call.1']
    #allocation4 [shape = 's32[1]{0}', space=sflag, size = 0x4, scoped, tag = 'scoped memory for tpu_custom_call.1']
    #allocation5 [shape = 'u8[8192]{0}', space=vmem, size = 0x2000, scoped, tag = 'input window, operand 1, single buffered']
    #allocation6 [shape = 's32[1]{0}', space=sflag, size = 0x4, scoped, tag = 'scoped memory for tpu_custom_call.1']
    #allocation7 [shape = 'u8[1024]{0}', space=vmem, size = 0x400, scoped, tag = 'output window, operand 0, single buffered']
    #allocation8 [shape = 'u8[1024]{0}', space=vmem, size = 0x400, scoped, tag = 'output window, operand 1, single buffered']
    #allocation9 [shape = 's32[1]{0}', space=sflag, size = 0x4, scoped, tag = 'scoped memory for tpu_custom_call.1']
    %9 = vsyncpa [#allocation3], 0
    %10 = vsyncpa [#allocation6], 0
    %11 = vsyncpa [#allocation4], 0
    %12 = vsyncpa [#allocation9], 0
    // Predicated region
    $region2: #{tpu_custom_call.1} parent=1 // pred_check
      _
    $region3: #{tpu_custom_call.1} parent=1 // pred_check_branch
      %14 = sbr.rel (0) target = $region5
    $region4: #{tpu_custom_call.1} parent=1 // pred_region
      %s16 = ssub.s32 256, 256
      %17 = vsyncadd [#allocation3], %s16
      %s18 = sshll.u32 [#allocation2], 4
      %s19 = int_to_ptr.vmem [resolvable:$true] %s18
      %24 = dma.hbm_to_vmem [thread:$0]  %s0, 256, %s19, [#allocation3], 128, 128, 8
    $region5: #{tpu_custom_call.1} parent=1 // pred_fallthru
      _
    // Predicated region
    $region6: #{tpu_custom_call.1} parent=1 // pred_check
      _
    $region7: #{tpu_custom_call.1} parent=1 // pred_check_branch
      %26 = sbr.rel (0) target = $region9
    $region8: #{tpu_custom_call.1} parent=1 // pred_region
      %s28 = ssub.s32 256, 256
      %29 = vsyncadd [#allocation6], %s28
      %s30 = sshll.u32 [#allocation5], 4
      %s31 = int_to_ptr.vmem [resolvable:$true] %s30
      %36 = dma.hbm_to_vmem [thread:$0]  %s1, 256, %s31, [#allocation6], 128, 128, 8
    $region9: #{tpu_custom_call.1} parent=1 // pred_fallthru
      _
    // Predicated region
    $region10: #{tpu_custom_call.1} parent=1 // pred_check
      _
    $region11: #{tpu_custom_call.1} parent=1 // pred_check_branch
      %38 = sbr.rel (0) target = $region13
    $region12: #{tpu_custom_call.1} parent=1 // pred_region
      %39 = dma.done [#allocation3], 256
    $region13: #{tpu_custom_call.1} parent=1 // pred_fallthru
      _
    // Predicated region
    $region14: #{tpu_custom_call.1} parent=1 // pred_check
      _
    $region15: #{tpu_custom_call.1} parent=1 // pred_check_branch
      %41 = sbr.rel (0) target = $region17
    $region16: #{tpu_custom_call.1} parent=1 // pred_region
      %42 = dma.done [#allocation6], 256
    $region17: #{tpu_custom_call.1} parent=1 // pred_fallthru
      _
    %v43 = vld [vmem:[#allocation2] sm:$0xff]
    %v44 = vld [vmem:[#allocation2 + $0x8] sm:$0xff]
    %v45 = vld [vmem:[#allocation5] sm:$0xff]
    %v46 = vld [vmem:[#allocation5 + $0x8] sm:$0xff]
    %v47 = vmul.f32 %v43, %v45
    %v48 = vmul.f32 %v44, %v46
    %v49 = vrot.slane %v47, 4
    %v50 = vadd.f32 %v47, %v49
    %v51 = vrot.slane %v50, 2
    %v52 = vadd.f32 %v50, %v51
    %v53 = vrot.slane %v52, 1
    %v54 = vadd.f32 %v52, %v53
    %v55 = vrot.slane %v48, 4
    %v56 = vadd.f32 %v48, %v55
    %v57 = vrot.slane %v56, 2
    %v58 = vadd.f32 %v56, %v57
    %v59 = vrot.slane %v58, 1
    %v60 = vadd.f32 %v58, %v59
    %vm63 = vcmask 1041409
    %v64 = vsel %vm63, %v60, %v54
    %66 = vst [vmem:[#allocation7] sm:$0x3] %v64
    %v67 = vadd.f32 %v43, %v45
    %v68 = vadd.f32 %v44, %v46
    %v69 = vrot.slane %v67, 4
    %v70 = vadd.f32 %v67, %v69
    %v71 = vrot.slane %v70, 2
    %v72 = vadd.f32 %v70, %v71
    %v73 = vrot.slane %v72, 1
    %v74 = vadd.f32 %v72, %v73
    %v75 = vrot.slane %v68, 4
    %v76 = vadd.f32 %v68, %v75
    %v77 = vrot.slane %v76, 2
    %v78 = vadd.f32 %v76, %v77
    %v79 = vrot.slane %v78, 1
    %v80 = vadd.f32 %v78, %v79
    %v83 = vsel %vm63, %v80, %v74
    %85 = vst [vmem:[#allocation8] sm:$0x3] %v83
    // Predicated region
    $region18: #{tpu_custom_call.1} parent=1 // pred_check
      _
    $region19: #{tpu_custom_call.1} parent=1 // pred_check_branch
      %87 = sbr.rel (0) target = $region21
    $region20: #{tpu_custom_call.1} parent=1 // pred_region
      %s89 = ssub.s32 32, 32
      %90 = vsyncadd [#allocation4], %s89
      %s92 = sshll.u32 [#allocation7], 4
      %s93 = int_to_ptr.vmem [resolvable:$true] %s92
      %95 = dma.vmem_to_hbm [thread:$0]  %s93, 32, %s2, [#allocation4]
    $region21: #{tpu_custom_call.1} parent=1 // pred_fallthru
      _
    // Predicated region
    $region22: #{tpu_custom_call.1} parent=1 // pred_check
      _
    $region23: #{tpu_custom_call.1} parent=1 // pred_check_branch
      %97 = sbr.rel (0) target = $region25
    $region24: #{tpu_custom_call.1} parent=1 // pred_region
      %s99 = ssub.s32 32, 32
      %100 = vsyncadd [#allocation9], %s99
      %s102 = sshll.u32 [#allocation8], 4
      %s103 = int_to_ptr.vmem [resolvable:$true] %s102
      %105 = dma.vmem_to_hbm [thread:$0]  %s103, 32, %s3, [#allocation9]
    $region25: #{tpu_custom_call.1} parent=1 // pred_fallthru
      _
    // Predicated region
    $region26: #{tpu_custom_call.1} parent=1 // pred_check
      _
    $region27: #{tpu_custom_call.1} parent=1 // pred_check_branch
      %107 = sbr.rel (0) target = $region29
    $region28: #{tpu_custom_call.1} parent=1 // pred_region
      %108 = dma.done [#allocation4], 32
    $region29: #{tpu_custom_call.1} parent=1 // pred_fallthru
      _
    // Predicated region
    $region30: #{tpu_custom_call.1} parent=1 // pred_check
      _
    $region31: #{tpu_custom_call.1} parent=1 // pred_check_branch
      %110 = sbr.rel (0) target = $region33
    $region32: #{tpu_custom_call.1} parent=1 // pred_region
      %111 = dma.done [#allocation9], 32
    $region33: #{tpu_custom_call.1} parent=1 // pred_fallthru
      _
    %112 = vsyncpa [#allocation3], 1
    %113 = vsyncpa [#allocation6], 1
    %114 = vsyncpa [#allocation4], 1
    %115 = vsyncpa [#allocation9], 1

</llo_original>
